<compile_context>
chip_gen: v7x
topology: tpu7x:2x2x1
jax: 0.10.0
libtpu: 0.0.40
codegen_flags: <defaults>
</compile_context>

<pallas_src>
import jax
import jax.numpy as jnp
from jax.experimental import pallas as pl
from jax.experimental.pallas import tpu as pltpu


def _round_up(v, m):
    return ((v + m - 1) // m) * m


def swiglu_kernel(x_ref, w_ref, b_ref, o_ref):
    tn = o_ref.shape[-1]
    x = x_ref[...]
    # One fused MXU matmul: columns [0:tn] are W1's block, [tn:2*tn] are W2's.
    h = jnp.dot(x, w_ref[...], preferred_element_type=jnp.float32) + b_ref[...]
    h1 = h[:, :tn]
    h2 = h[:, tn:]
    # SiLU(h1) * h2 in f32 on the VPU/EUP, downcast only at the store.
    o_ref[...] = (h1 * jax.nn.sigmoid(h1) * h2).astype(o_ref.dtype)


def swiglu(x, w1, b1, w2, b2, *, tile_m=512, tile_n=256,
           compute_dtype=None, vmem_limit_bytes=None):
    """Fused SwiGLU: silu(x @ w1 + b1) * (x @ w2 + b2).

    x: (M, K); w1, w2: (K, N) (nn.Linear weights pre-transposed); b1, b2: (N,).
    Returns (M, N) in x.dtype.
    """
    M, K = x.shape
    N = w1.shape[1]
    out_dtype = x.dtype

    if compute_dtype is not None:
        x = x.astype(compute_dtype)
        w1 = w1.astype(compute_dtype)
        w2 = w2.astype(compute_dtype)
    # Biases are added to the f32 MXU accumulator -> keep them f32.
    b1 = b1.astype(jnp.float32)
    b2 = b2.astype(jnp.float32)

    # --- tile sizing (sublane-aligned M, lane-dense 128-multiple N) ---------
    sub = 16 if x.dtype == jnp.bfloat16 else 8
    tile_m = max(sub, min(tile_m, _round_up(M, sub)))
    tile_m = _round_up(tile_m, sub)
    m_pad = _round_up(M, tile_m)

    tile_n = max(128, min(tile_n, _round_up(N, 128)))
    tile_n = _round_up(tile_n, 128)
    n_pad = _round_up(N, tile_n)

    m_blocks = m_pad // tile_m
    n_blocks = n_pad // tile_n

    # --- padding + W1/W2 fusion --------------------------------------------
    if m_pad != M:
        x = jnp.pad(x, ((0, m_pad - M), (0, 0)))
    if n_pad != N:
        w1 = jnp.pad(w1, ((0, 0), (0, n_pad - N)))
        w2 = jnp.pad(w2, ((0, 0), (0, n_pad - N)))
        b1 = jnp.pad(b1, (0, n_pad - N))
        b2 = jnp.pad(b2, (0, n_pad - N))

    # Interleave per-N-block so weight block j is contiguous [W1_j | W2_j]:
    # columns [j*2*tile_n, (j+1)*2*tile_n) of the fused weight.
    w12 = jnp.concatenate(
        [w1.reshape(K, n_blocks, tile_n), w2.reshape(K, n_blocks, tile_n)],
        axis=2).reshape(K, n_blocks * 2 * tile_n)
    b12 = jnp.concatenate(
        [b1.reshape(n_blocks, tile_n), b2.reshape(n_blocks, tile_n)],
        axis=1).reshape(1, n_blocks * 2 * tile_n)

    # --- scheduler hint ------------------------------------------------------
    bpe_in = jnp.dtype(x.dtype).itemsize
    cost = pl.CostEstimate(
        flops=4 * m_pad * K * n_pad + 4 * m_pad * n_pad,
        transcendentals=m_pad * n_pad,
        bytes_accessed=(m_pad * K * bpe_in
                        + w12.size * bpe_in
                        + b12.size * 4
                        + m_pad * n_pad * jnp.dtype(out_dtype).itemsize),
    )

    out = pl.pallas_call(
        swiglu_kernel,
        out_shape=jax.ShapeDtypeStruct((m_pad, n_pad), out_dtype),
        grid_spec=pltpu.PrefetchScalarGridSpec(
            num_scalar_prefetch=0,
            grid=(m_blocks, n_blocks),
            in_specs=[
                pl.BlockSpec((tile_m, K), lambda i, j: (i, 0)),        # x tile
                pl.BlockSpec((K, 2 * tile_n), lambda i, j: (0, j)),    # fused W block
                pl.BlockSpec((1, 2 * tile_n), lambda i, j: (0, j)),    # fused bias block
            ],
            out_specs=pl.BlockSpec((tile_m, tile_n), lambda i, j: (i, j)),
        ),
        compiler_params=pltpu.CompilerParams(
            dimension_semantics=("parallel", "parallel"),
            vmem_limit_bytes=vmem_limit_bytes,  # raise for large tiles (v6e), budget 64 MiB on v7x
        ),
        cost_estimate=cost,
    )(x, w12, b12)

    if m_pad != M or n_pad != N:
        out = out[:M, :N]
    return out


if __name__ == "__main__":
    key = jax.random.PRNGKey(0)
    k_x, k_w1, k_b1, k_w2, k_b2 = jax.random.split(key, 5)

    batch = 16
    in_features = 32
    out_features = 64

    x = jax.random.normal(k_x, (batch, in_features), dtype=jnp.float32)

    # nn.Linear-shaped params: weight (out, in), bias (out,).
    bound = 1.0 / (in_features ** 0.5)
    w1_t = jax.random.uniform(k_w1, (out_features, in_features), minval=-bound, maxval=bound)
    b1 = jax.random.uniform(k_b1, (out_features,), minval=-bound, maxval=bound)
    w2_t = jax.random.uniform(k_w2, (out_features, in_features), minval=-bound, maxval=bound)
    b2 = jax.random.uniform(k_b2, (out_features,), minval=-bound, maxval=bound)

    # Pre-transpose to (in, out) for the kernel's x @ W layout.
    w1 = w1_t.T
    w2 = w2_t.T

    # Pure-JAX reference.
    h1 = x @ w1 + b1
    h2 = x @ w2 + b2
    ref = (h1 * jax.nn.sigmoid(h1)) * h2

    # f32 path (tight tolerance).
    out = jax.block_until_ready(swiglu(x, w1, b1, w2, b2))
    assert out.shape == (batch, out_features)
    assert jnp.allclose(out, ref, atol=1e-5, rtol=1e-5), "f32 mismatch vs reference"

    # bf16 compute path (MXU fast path, halved bytes); looser tolerance.
    out_bf16 = jax.block_until_ready(
        swiglu(x, w1, b1, w2, b2, compute_dtype=jnp.bfloat16))
    assert out_bf16.shape == (batch, out_features)
    assert jnp.allclose(out_bf16, ref, atol=5e-2, rtol=5e-2), "bf16 mismatch vs reference"

    print("KERNEL_OK")
</pallas_src>

<mosaic_0001>
module attributes {stable_mosaic.version = 11 : i64} {
  func.func @swiglu_kernel(%arg0: i32, %arg1: i32, %arg2: memref<16x32xf32, #tpu.memory_space<vmem>>, %arg3: memref<32x256xf32, #tpu.memory_space<vmem>>, %arg4: memref<1x256xf32, #tpu.memory_space<vmem>>, %arg5: memref<16x128xf32, #tpu.memory_space<vmem>>) attributes {dimension_semantics = [#tpu.dimension_semantics<parallel>, #tpu.dimension_semantics<parallel>], iteration_bounds = array<i64: 1, 1>, scalar_prefetch = 0 : i64, scratch_operands = 0 : i64, tpu.core_type = #tpu.core_type<tc>, window_params = [{transform_indices = @transform_0, window_bounds = array<i64: 16, 32>}, {transform_indices = @transform_1, window_bounds = array<i64: 32, 256>}, {transform_indices = @transform_2, window_bounds = array<i64: 1, 256>}, {transform_indices = @transform_3, window_bounds = array<i64: 16, 128>}]} {
    %c0 = arith.constant 0 : index
    %c0_0 = arith.constant 0 : index
    %0 = vector.load %arg2[%c0, %c0_0] : memref<16x32xf32, #tpu.memory_space<vmem>>, vector<16x32xf32>
    %c0_1 = arith.constant 0 : index
    %c0_2 = arith.constant 0 : index
    %1 = vector.load %arg3[%c0_1, %c0_2] : memref<32x256xf32, #tpu.memory_space<vmem>>, vector<32x256xf32>
    %cst = arith.constant dense<0.000000e+00> : vector<16x256xf32>
    %2 = tpu.matmul %0, %1, %cst {dimension_numbers = #tpu.dot_dimension_numbers<[1], [0], [0], [1], [0, 0, 1, 1], [], []>} : vector<16x32xf32>, vector<32x256xf32>, vector<16x256xf32> -> vector<16x256xf32>
    %c0_3 = arith.constant 0 : index
    %c0_4 = arith.constant 0 : index
    %3 = vector.load %arg4[%c0_3, %c0_4] : memref<1x256xf32, #tpu.memory_space<vmem>>, vector<1x256xf32>
    %4 = vector.broadcast %3 : vector<1x256xf32> to vector<16x256xf32>
    %5 = arith.addf %2, %4 : vector<16x256xf32>
    %6 = vector.extract_strided_slice %5 {offsets = [0, 0], sizes = [16, 128], strides = [1, 1]} : vector<16x256xf32> to vector<16x128xf32>
    %7 = vector.extract_strided_slice %5 {offsets = [0, 128], sizes = [16, 128], strides = [1, 1]} : vector<16x256xf32> to vector<16x128xf32>
    %8 = arith.negf %6 : vector<16x128xf32>
    %9 = math.exp %8 : vector<16x128xf32>
    %cst_5 = arith.constant 1.000000e+00 : f32
    %10 = vector.broadcast %cst_5 : f32 to vector<16x128xf32>
    %11 = arith.addf %10, %9 : vector<16x128xf32>
    %12 = arith.divf %10, %11 : vector<16x128xf32>
    %13 = arith.mulf %6, %12 : vector<16x128xf32>
    %14 = arith.mulf %13, %7 : vector<16x128xf32>
    %c0_6 = arith.constant 0 : index
    %c0_7 = arith.constant 0 : index
    %15 = vector.load %arg5[%c0_6, %c0_7] : memref<16x128xf32, #tpu.memory_space<vmem>>, vector<16x128xf32>
    tpu.vector_store %arg5[%c0_6, %c0_7], %14 {strides = array<i32>} : memref<16x128xf32, #tpu.memory_space<vmem>>, vector<16x128xf32>,
    return
  }
  func.func @transform_0(%arg0: i32, %arg1: i32) -> (i32, i32) {
    %c0_i32 = arith.constant 0 : i32
    %c0_i32_0 = arith.constant 0 : i32
    return %arg0, %c0_i32 : i32, i32
  }
  func.func @transform_1(%arg0: i32, %arg1: i32) -> (i32, i32) {
    %c0_i32 = arith.constant 0 : i32
    %c0_i32_0 = arith.constant 0 : i32
    return %c0_i32, %arg1 : i32, i32
  }
  func.func @transform_2(%arg0: i32, %arg1: i32) -> (i32, i32) {
    %c0_i32 = arith.constant 0 : i32
    %c0_i32_0 = arith.constant 0 : i32
    return %c0_i32, %arg1 : i32, i32
  }
  func.func @transform_3(%arg0: i32, %arg1: i32) -> (i32, i32) {
    %c0_i32 = arith.constant 0 : i32
    return %arg0, %arg1 : i32, i32
  }
}

</mosaic_0001>

<llo_original>
// kernel: tpu_custom_call.1
$region0: #{tpu_custom_call.1}
  #allocation0 [shape = 'u32[]', space=smem, size = 0x4, offset = 0x4, fixed_abs, tag = 'smem constant byte address 0x4 - core index']
  #allocation1 [shape = 'u32[144,128]{1,0:T(1,128)}', space=vmem, size = 0x12000, scoped, tag = 'internal scratch']
  %s0 = inlined_call_operand.hbm [shape: f32[16,32], index: 0, kind: input, shape index: {}]
  %s1 = inlined_call_operand.hbm [shape: f32[32,256], index: 1, kind: input, shape index: {}]
  %s2 = inlined_call_operand.vmem [shape: f32[1,256], index: 2, kind: input, shape index: {}]
  %s3 = inlined_call_operand.hbm [shape: f32[16,128], index: 3, kind: output, shape index: {}]
  %s4 = sld [smem:[#allocation0]]
  $region30: #{tpu_custom_call.1} parent=0
    _
  %s6 = ssub.s32 1, %s4
  %s7 = scalar_select 0, %s6, %s4
  $region1: #{tpu_custom_call.1} parent=0
    #allocation2 [shape = 'u8[8192]{0}', space=vmem, size = 0x2000, scoped, tag = 'input window, operand 0, single buffered']
    #allocation3 [shape = 's32[1]{0}', space=sflag, size = 0x4, scoped, tag = 'scoped memory for tpu_custom_call.1']
    #allocation4 [shape = 's32[1]{0}', space=sflag, size = 0x4, scoped, tag = 'scoped memory for tpu_custom_call.1']
    #allocation5 [shape = 'u8[32768]{0}', space=vmem, size = 0x8000, scoped, tag = 'input window, operand 1, single buffered']
    #allocation6 [shape = 's32[1]{0}', space=sflag, size = 0x4, scoped, tag = 'scoped memory for tpu_custom_call.1']
    #allocation7 [shape = 'u8[8192]{0}', space=vmem, size = 0x2000, scoped, tag = 'output window, operand 0, single buffered']
    %8 = vsyncpa [#allocation3], 0
    %9 = vsyncpa [#allocation6], 0
    %10 = vsyncpa [#allocation4], 0
    // Predicated region
    $region2: #{tpu_custom_call.1} parent=1 // pred_check
      _
    $region3: #{tpu_custom_call.1} parent=1 // pred_check_branch
      %12 = sbr.rel (0) target = $region5
    $region4: #{tpu_custom_call.1} parent=1 // pred_region
      %s14 = ssub.s32 256, 256
      %15 = vsyncadd [#allocation3], %s14
      %s16 = sshll.u32 [#allocation2], 4
      %s17 = int_to_ptr.vmem [resolvable:$true] %s16
      %22 = dma.hbm_to_vmem [thread:$0]  %s0, 256, %s17, [#allocation3], 128, 128, 8
    $region5: #{tpu_custom_call.1} parent=1 // pred_fallthru
      _
    // Predicated region
    $region6: #{tpu_custom_call.1} parent=1 // pred_check
      _
    $region7: #{tpu_custom_call.1} parent=1 // pred_check_branch
      %24 = sbr.rel (0) target = $region9
    $region8: #{tpu_custom_call.1} parent=1 // pred_region
      %s26 = ssub.s32 1024, 1024
      %27 = vsyncadd [#allocation6], %s26
      %s28 = sshll.u32 [#allocation5], 4
      %s29 = int_to_ptr.vmem [resolvable:$true] %s28
      %34 = dma.hbm_to_vmem [thread:$0]  %s1, 1024, %s29, [#allocation6], 256, 256, 16
    $region9: #{tpu_custom_call.1} parent=1 // pred_fallthru
      _
    // Predicated region
    $region10: #{tpu_custom_call.1} parent=1 // pred_check
      _
    $region11: #{tpu_custom_call.1} parent=1 // pred_check_branch
      %36 = sbr.rel (0) target = $region13
    $region12: #{tpu_custom_call.1} parent=1 // pred_region
      _
    $region13: #{tpu_custom_call.1} parent=1 // pred_fallthru
      _
    // Predicated region
    $region14: #{tpu_custom_call.1} parent=1 // pred_check
      _
    $region15: #{tpu_custom_call.1} parent=1 // pred_check_branch
      %38 = sbr.rel (0) target = $region17
    $region16: #{tpu_custom_call.1} parent=1 // pred_region
      %39 = dma.done [#allocation3], 256
    $region17: #{tpu_custom_call.1} parent=1 // pred_fallthru
      _
    // Predicated region
    $region18: #{tpu_custom_call.1} parent=1 // pred_check
      _
    $region19: #{tpu_custom_call.1} parent=1 // pred_check_branch
      %41 = sbr.rel (0) target = $region21
    $region20: #{tpu_custom_call.1} parent=1 // pred_region
      %42 = dma.done [#allocation6], 1024
    $region21: #{tpu_custom_call.1} parent=1 // pred_fallthru
      _
    %v43 = vld [vmem:[#allocation2] sm:$0xff]
    %v44 = vld [vmem:[#allocation2 + $0x8] sm:$0xff]
    %v45 = vld [vmem:[#allocation5] sm:$0xff]
    %v46 = vld [vmem:[#allocation5 + $0x8] sm:$0xff]
    %v47 = vld [vmem:[#allocation5 + $0x10] sm:$0xff]
    %v48 = vld [vmem:[#allocation5 + $0x18] sm:$0xff]
    %v49 = vld [vmem:[#allocation5 + $0x20] sm:$0xff]
    %v50 = vld [vmem:[#allocation5 + $0x28] sm:$0xff]
    %v51 = vld [vmem:[#allocation5 + $0x30] sm:$0xff]
    %v52 = vld [vmem:[#allocation5 + $0x38] sm:$0xff]
    %v53 = vld [vmem:[%s2] sm:$0x3]
    %v55 = vlaneseq
    %v56 = vshrl.u32 %v55, 7
    %v57 = vsub.s32 0, %v56
    %v58 = vrot.slane %v53, %v57
    %v59 = vlaneseq
    %v60 = vshrl.u32 %v59, 7
    %v61 = vsub.s32 1, %v60
    %v62 = vrot.slane %v53, %v61
    %vm65 = vcmask 261120
    %v67 = vsel %vm65, %v43, 0
    %v70 = vsel %vm65, %v44, 0
    %72 = vmatprep.subr.mxu0 %v46
    %73 = vmatpush1.msra.mxu0 %v45
    %74 = vmatprep.subr.mxu0 %v48
    %75 = vmatpush1.msra.mxu0 %v47
    %76 = vmatprep.subr.mxu0 %v50
    %77 = vmatpush1.msra.mxu0 %v49
    %78 = vmatprep.subr.mxu0 %v52
    %79 = vmatpush1.msra.mxu0 %v51
    %80 = vmatprep.subr.mxu0 0.0
    %81 = vmatpush1.msra.mxu0 0.0
    %82 = vmatprep.subr.mxu0 0.0
    %83 = vmatpush1.msra.mxu0 0.0
    %84 = vmatprep.subr.mxu0 0.0
    %85 = vmatpush1.msra.mxu0 0.0
    %86 = vmatprep.subr.mxu0 0.0
    %87 = vmatpush1.msra.mxu0 0.0
    %88 = vmatprep.subr.mxu0 0.0
    %89 = vmatpush1.msra.mxu0 0.0
    %90 = vmatprep.subr.mxu0 0.0
    %91 = vmatpush1.msra.mxu0 0.0
    %92 = vmatprep.subr.mxu0 0.0
    %93 = vmatpush1.msra.mxu0 0.0
    %94 = vmatprep.subr.mxu0 0.0
    %95 = vmatpush1.msra.mxu0 0.0
    %96 = vmatprep.subr.mxu0 0.0
    %97 = vmatpush1.msra.mxu0 0.0
    %98 = vmatprep.subr.mxu0 0.0
    %99 = vmatpush1.msra.mxu0 0.0
    %100 = vmatprep.subr.mxu0 0.0
    %101 = vmatpush1.msra.mxu0 0.0
    %102 = vmatprep.subr.mxu0 0.0
    %103 = vmatpush1.msra.mxu0 0.0
    %104 = vmatprep.subr.mxu0 0.0
    %105 = vmatpush1.msra.mxu0 0.0
    %106 = vmatprep.subr.mxu0 0.0
    %107 = vmatpush1.msra.mxu0 0.0
    %108 = vmatprep.subr.mxu0 0.0
    %109 = vmatpush1.msra.mxu0 0.0
    %110 = vmatprep.subr.mxu0 0.0
    %111 = vmatpush1.msra.mxu0 0.0
    %112 = vmatprep.subr.mxu0 0.0
    %113 = vmatpush1.msra.mxu0 0.0
    %114 = vmatprep.subr.mxu0 0.0
    %115 = vmatpush1.msra.mxu0 0.0
    %116 = vmatprep.subr.mxu0 0.0
    %117 = vmatpush1.msra.mxu0 0.0
    %118 = vmatprep.subr.mxu0 0.0
    %119 = vmatpush1.msra.mxu0 0.0
    %120 = vmatprep.subr.mxu0 0.0
    %121 = vmatpush1.msra.mxu0 0.0
    %122 = vmatprep.subr.mxu0 0.0
    %123 = vmatpush1.msra.mxu0 0.0
    %124 = vmatprep.subr.mxu0 0.0
    %125 = vmatpush1.msra.mxu0 0.0
    %126 = vmatprep.subr.mxu0 0.0
    %127 = vmatpush1.msra.mxu0 0.0
    %128 = vmatprep.subr.mxu0 0.0
    %129 = vmatpush1.msra.mxu0 0.0
    %130 = vmatprep.subr.mxu0 0.0
    %131 = vmatpush1.msra.mxu0 0.0
    %132 = vmatprep.subr.mxu0 0.0
    %133 = vmatpush1.msra.mxu0 0.0
    %134 = vmatprep.subr.mxu0 0.0
    %135 = vmatpush1.msra.mxu0 0.0
    %136 = vmatprep.mubr.f32.mxu0 0.0
    %137 = vmatmul.mubr.f32.gmra.mrb[0].mxu0 %v67
    %v138 = vpop.f32.mrb[0].mxu0
    %v139 = vadd.f32 %v58, %v138
    %v140 = vpop.f32.mrb[0].mxu0
    %v141 = vadd.f32 %v62, %v140
    %142 = vmatprep.mubr.f32.mxu0 0.0
    %143 = vmatmul.mubr.f32.gmra.mrb[0].mxu0 %v70
    %v144 = vpop.f32.mrb[0].mxu0
    %v145 = vadd.f32 %v58, %v144
    %v146 = vpop.f32.mrb[0].mxu0
    %v147 = vadd.f32 %v62, %v146
    %148 = vdwg.mxu0
    %v149 = vxor.u32 %v139, 2147483648
    %v150 = vxor.u32 %v145, 2147483648
    %v151 = vmul.f32 %v149, 1.442695
    %v152 = vpow.pop %v151
    %v153 = vmul.f32 %v150, 1.442695
    %v154 = vpow.pop %v153
    %v155 = vadd.f32 %v152, 1.0
    %v156 = vadd.f32 %v154, 1.0
    %v157 = vrcp.pop %v155
    %v158 = vmul.f32 1.0, %v157
    %v159 = vrcp.pop %v156
    %v160 = vmul.f32 1.0, %v159
    %v161 = vmul.f32 %v139, %v158
    %v162 = vmul.f32 %v145, %v160
    %v163 = vmul.f32 %v161, %v141
    %v164 = vmul.f32 %v162, %v147
    %165 = vst [vmem:[#allocation7] sm:$0xff] %v163
    %166 = vst [vmem:[#allocation7 + $0x8] sm:$0xff] %v164
    // Predicated region
    $region22: #{tpu_custom_call.1} parent=1 // pred_check
      _
    $region23: #{tpu_custom_call.1} parent=1 // pred_check_branch
      %168 = sbr.rel (0) target = $region25
    $region24: #{tpu_custom_call.1} parent=1 // pred_region
      %s170 = ssub.s32 256, 256
      %171 = vsyncadd [#allocation4], %s170
      %s172 = sshll.u32 [#allocation7], 4
      %s173 = int_to_ptr.vmem [resolvable:$true] %s172
      %178 = dma.vmem_to_hbm [thread:$0]  %s173, 256, %s3, [#allocation4], 128, 128, 8
    $region25: #{tpu_custom_call.1} parent=1 // pred_fallthru
      _
    // Predicated region
    $region26: #{tpu_custom_call.1} parent=1 // pred_check
      _
    $region27: #{tpu_custom_call.1} parent=1 // pred_check_branch
      %180 = sbr.rel (0) target = $region29
    $region28: #{tpu_custom_call.1} parent=1 // pred_region
      %181 = dma.done [#allocation4], 256
    $region29: #{tpu_custom_call.1} parent=1 // pred_fallthru
      _
    %182 = vsyncpa [#allocation3], 1
    %183 = vsyncpa [#allocation6], 1
    %184 = vsyncpa [#allocation4], 1

</llo_original>
